<compile_context>
chip_gen: v6e
topology: v6e:2x2x1
jax: 0.10.0
libtpu: 0.0.40
codegen_flags: <defaults>
</compile_context>

<pallas_src>
import math
import functools

import numpy as np
import jax
import jax.numpy as jnp
from jax import lax
from jax.experimental import pallas as pl
from jax.experimental.pallas import tpu as pltpu


# (month, day, weekday, hour) vocab sizes; lowest_level=4 drops minute.
_VOCABS = (13, 32, 7, 24)
# Per-feature slices of the fused vocab, padded to multiples of 8 sublanes so
# each feature occupies whole vregs: offsets (0, 16, 48, 56), total K = 80.
_SLICE_SIZES = (16, 32, 8, 24)
_FUSED_V = sum(_SLICE_SIZES)          # 80
_MAX_ROW_TILE = 8192                  # rows per grid step (review: 2048-8192)


def fixed_embedding_table(c_in: int, d_model: int) -> jnp.ndarray:
    """Replicates FixedEmbedding.__init__ weight construction (sin/cos)."""
    pos = np.arange(0, c_in, dtype=np.float32)[:, None]
    div = np.exp(np.arange(0, d_model, 2, dtype=np.float32)
                 * -(math.log(10000.0) / d_model))
    w = np.zeros((c_in, d_model), dtype=np.float32)
    w[:, 0::2] = np.sin(pos * div)
    w[:, 1::2] = np.cos(pos * div)
    return jnp.asarray(w)


def _fused_table(tables) -> jnp.ndarray:
    """Stack the 4 tables into one (80, D) table with 8-aligned slices."""
    parts = []
    for tbl, size in zip(tables, _SLICE_SIZES):
        t = tbl.astype(jnp.float32)
        pad = size - t.shape[0]
        if pad:
            t = jnp.pad(t, ((0, pad), (0, 0)))
        parts.append(t)
    return jnp.concatenate(parts, axis=0)


def _round_up(x: int, m: int) -> int:
    return ((x + m - 1) // m) * m


def _choose_row_tile(n_rows: int, max_tile: int = _MAX_ROW_TILE) -> int:
    """Row tile: as large as possible, but keep >= 2 grid steps when there is
    enough data (v7x has 2 TensorCores sharding the "parallel" grid axis)."""
    n128 = _round_up(max(n_rows, 1), 128)
    if n128 <= 256:
        return n128
    steps = max(2, pl.cdiv(n128, max_tile))
    return min(_round_up(pl.cdiv(n128, steps), 128), max_tile)


def _temporal_embed_kernel(x_ref, tbl_ref, o_ref):
    # x_ref  : (4, TS) int32 -- raw month/day/weekday/hour rows, lane-dense.
    # tbl_ref: (80, D) f32   -- fused table, 8-aligned per-feature slices.
    # o_ref  : (TS, D)
    parts = []
    for f, size in enumerate(_SLICE_SIZES):
        # (size, 1) iota: the compare broadcasts the index row along sublanes
        # and the iota constant along lanes -- no (128, TS) iota materialized,
        # and each feature is compared only against its own vocab slice, so an
        # out-of-range index matches nothing (zero contribution).
        iota_f = lax.broadcasted_iota(jnp.int32, (size, 1), 0)
        parts.append((x_ref[f:f + 1, :] == iota_f).astype(jnp.float32))
    mh_t = jnp.concatenate(parts, axis=0)          # (80, TS) multi-hot
    # Contract the fused-vocab axis (TN dimension numbers) -> (TS, D).
    out = lax.dot_general(
        mh_t, tbl_ref[...],
        dimension_numbers=(((0,), (0,)), ((), ())),
        preferred_element_type=jnp.float32,
        precision=lax.Precision.HIGHEST)
    o_ref[...] = out.astype(o_ref.dtype)


@functools.partial(jax.jit, static_argnames=("out_dtype",))
def temporal_embedding(x_idx, month_tbl, day_tbl, weekday_tbl, hour_tbl,
                       *, out_dtype=jnp.float32):
    """x_idx: (B, S, >=4) integer datetime features. Returns (B, S, D)."""
    B, S, _ = x_idx.shape
    D = month_tbl.shape[1]
    N = B * S

    fused = _fused_table((month_tbl, day_tbl, weekday_tbl, hour_tbl))  # (80, D)

    # Lane-dense per-feature index rows (4, N).  Offsets are NOT added here --
    # they are baked into the per-slice compares inside the kernel.
    # TODO(synk): move this transpose in-kernel ((TS,4)->(4,TS) relayout) to
    # drop the small extra index pass; kept wrapper-side (fused under jit) for
    # lowering robustness.
    idx_t = jnp.transpose(x_idx[..., :4].astype(jnp.int32).reshape(N, 4))

    TS = _choose_row_tile(N)
    N_pad = pl.cdiv(N, TS) * TS
    if N_pad != N:
        idx_t = jnp.pad(idx_t, ((0, 0), (0, N_pad - N)))
    grid = (N_pad // TS,)

    out = pl.pallas_call(
        _temporal_embed_kernel,
        out_shape=jax.ShapeDtypeStruct((N_pad, D), out_dtype),
        grid_spec=pltpu.PrefetchScalarGridSpec(
            num_scalar_prefetch=0,
            grid=grid,
            in_specs=[pl.BlockSpec((4, TS), lambda i: (0, i)),
                      pl.BlockSpec((_FUSED_V, D), lambda i: (0, 0))],
            out_specs=pl.BlockSpec((TS, D), lambda i: (i, 0)),
        ),
        compiler_params=pltpu.CompilerParams(
            dimension_semantics=("parallel",)),
    )(idx_t, fused)

    return out[:N].reshape(B, S, D)


if __name__ == "__main__":
    d_model = 32
    B, S = 2, 8

    # Fixed (deterministic) sinusoidal embedding tables, exactly as __init__.
    month_tbl = fixed_embedding_table(13, d_model)
    day_tbl = fixed_embedding_table(32, d_model)
    weekday_tbl = fixed_embedding_table(7, d_model)
    hour_tbl = fixed_embedding_table(24, d_model)

    # Deterministic datetime-feature input (B, S, 5): month, day, weekday,
    # hour, minute (minute unused for lowest_level=4).
    key = jax.random.PRNGKey(0)
    k0, k1, k2, k3, k4 = jax.random.split(key, 5)
    x = jnp.stack([
        jax.random.randint(k0, (B, S), 0, 13),
        jax.random.randint(k1, (B, S), 0, 32),
        jax.random.randint(k2, (B, S), 0, 7),
        jax.random.randint(k3, (B, S), 0, 24),
        jax.random.randint(k4, (B, S), 0, 4),
    ], axis=-1).astype(jnp.int32)

    out = temporal_embedding(x, month_tbl, day_tbl, weekday_tbl, hour_tbl)
    out = jax.block_until_ready(out)

    # Pure-JAX reference (nn.Embedding lookup == take along vocab axis).
    ref = (jnp.take(month_tbl, x[..., 0], axis=0)
           + jnp.take(day_tbl, x[..., 1], axis=0)
           + jnp.take(weekday_tbl, x[..., 2], axis=0)
           + jnp.take(hour_tbl, x[..., 3], axis=0))
    np.testing.assert_allclose(np.asarray(out), np.asarray(ref),
                               rtol=1e-6, atol=1e-6)

    print("KERNEL_OK")
</pallas_src>

<mosaic_0001>
module attributes {stable_mosaic.version = 11 : i64} {
  func.func @_temporal_embed_kernel(%arg0: i32, %arg1: memref<4x128xi32, #tpu.memory_space<vmem>>, %arg2: memref<80x32xf32, #tpu.memory_space<vmem>>, %arg3: memref<128x32xf32, #tpu.memory_space<vmem>>) attributes {dimension_semantics = [#tpu.dimension_semantics<parallel>], iteration_bounds = array<i64: 1>, scalar_prefetch = 0 : i64, scratch_operands = 0 : i64, tpu.core_type = #tpu.core_type<tc>, window_params = [{transform_indices = @transform_0, window_bounds = array<i64: 4, 128>}, {pipeline_mode = #tpu.pipeline_mode<synchronous>, transform_indices = @transform_1, window_bounds = array<i64: 80, 32>}, {transform_indices = @transform_2, window_bounds = array<i64: 128, 32>}]} {
    %0 = tpu.iota {dimensions = array<i32: 0>} : vector<16x1xi32>
    %c0 = arith.constant 0 : index
    %c0_0 = arith.constant 0 : index
    %1 = vector.load %arg1[%c0, %c0_0] : memref<4x128xi32, #tpu.memory_space<vmem>>, vector<1x128xi32>
    %2 = vector.broadcast %1 : vector<1x128xi32> to vector<16x128xi32>
    %3 = vector.broadcast %0 : vector<16x1xi32> to vector<16x128xi32>
    %4 = arith.cmpi eq, %2, %3 : vector<16x128xi32>
    %5 = arith.extui %4 : vector<16x128xi1> to vector<16x128xi32>
    %6 = arith.sitofp %5 : vector<16x128xi32> to vector<16x128xf32>
    %7 = tpu.iota {dimensions = array<i32: 0>} : vector<32x1xi32>
    %c1 = arith.constant 1 : index
    %c0_1 = arith.constant 0 : index
    %8 = vector.load %arg1[%c1, %c0_1] : memref<4x128xi32, #tpu.memory_space<vmem>>, vector<1x128xi32>
    %9 = vector.broadcast %8 : vector<1x128xi32> to vector<32x128xi32>
    %10 = vector.broadcast %7 : vector<32x1xi32> to vector<32x128xi32>
    %11 = arith.cmpi eq, %9, %10 : vector<32x128xi32>
    %12 = arith.extui %11 : vector<32x128xi1> to vector<32x128xi32>
    %13 = arith.sitofp %12 : vector<32x128xi32> to vector<32x128xf32>
    %14 = tpu.iota {dimensions = array<i32: 0>} : vector<8x1xi32>
    %c2 = arith.constant 2 : index
    %c0_2 = arith.constant 0 : index
    %15 = vector.load %arg1[%c2, %c0_2] : memref<4x128xi32, #tpu.memory_space<vmem>>, vector<1x128xi32>
    %16 = vector.broadcast %15 : vector<1x128xi32> to vector<8x128xi32>
    %17 = vector.broadcast %14 : vector<8x1xi32> to vector<8x128xi32>
    %18 = arith.cmpi eq, %16, %17 : vector<8x128xi32>
    %19 = arith.extui %18 : vector<8x128xi1> to vector<8x128xi32>
    %20 = arith.sitofp %19 : vector<8x128xi32> to vector<8x128xf32>
    %21 = tpu.iota {dimensions = array<i32: 0>} : vector<24x1xi32>
    %c3 = arith.constant 3 : index
    %c0_3 = arith.constant 0 : index
    %22 = vector.load %arg1[%c3, %c0_3] : memref<4x128xi32, #tpu.memory_space<vmem>>, vector<1x128xi32>
    %23 = vector.broadcast %22 : vector<1x128xi32> to vector<24x128xi32>
    %24 = vector.broadcast %21 : vector<24x1xi32> to vector<24x128xi32>
    %25 = arith.cmpi eq, %23, %24 : vector<24x128xi32>
    %26 = arith.extui %25 : vector<24x128xi1> to vector<24x128xi32>
    %27 = arith.sitofp %26 : vector<24x128xi32> to vector<24x128xf32>
    %28 = tpu.concatenate %6, %13, %20, %27 in 0 : vector<16x128xf32>, vector<32x128xf32>, vector<8x128xf32>, vector<24x128xf32> -> vector<80x128xf32>
    %c0_4 = arith.constant 0 : index
    %c0_5 = arith.constant 0 : index
    %29 = vector.load %arg2[%c0_4, %c0_5] : memref<80x32xf32, #tpu.memory_space<vmem>>, vector<80x32xf32>
    %cst = arith.constant dense<0.000000e+00> : vector<128x32xf32>
    %30 = tpu.matmul %28, %29, %cst {dimension_numbers = #tpu.dot_dimension_numbers<[0], [0], [1], [1], [0, 1, 1, 1], [], []>, precision = #tpu.contract_precision<fp32>} : vector<80x128xf32>, vector<80x32xf32>, vector<128x32xf32> -> vector<128x32xf32>
    %c0_6 = arith.constant 0 : index
    %c0_7 = arith.constant 0 : index
    %31 = vector.load %arg3[%c0_6, %c0_7] : memref<128x32xf32, #tpu.memory_space<vmem>>, vector<128x32xf32>
    tpu.vector_store %arg3[%c0_6, %c0_7], %30 {strides = array<i32>} : memref<128x32xf32, #tpu.memory_space<vmem>>, vector<128x32xf32>,
    return
  }
  func.func @transform_0(%arg0: i32) -> (i32, i32) {
    %c0_i32 = arith.constant 0 : i32
    %c0_i32_0 = arith.constant 0 : i32
    return %c0_i32, %arg0 : i32, i32
  }
  func.func @transform_1(%arg0: i32) -> (i32, i32) {
    %c0_i32 = arith.constant 0 : i32
    %c0_i32_0 = arith.constant 0 : i32
    %c0_i32_1 = arith.constant 0 : i32
    return %c0_i32, %c0_i32_0 : i32, i32
  }
  func.func @transform_2(%arg0: i32) -> (i32, i32) {
    %c0_i32 = arith.constant 0 : i32
    %c0_i32_0 = arith.constant 0 : i32
    return %arg0, %c0_i32 : i32, i32
  }
}

</mosaic_0001>

<llo_original>
// kernel: temporal_embedding.1
$region0: #{temporal_embedding.1}
  #allocation0 [shape = 'u32[]', space=smem, size = 0x4, offset = 0x4, fixed_abs, tag = 'smem constant byte address 0x4 - core index']
  #allocation1 [shape = 'u32[144,128]{1,0:T(1,128)}', space=vmem, size = 0x12000, scoped, tag = 'internal scratch']
  %s0 = inlined_call_operand.vmem [shape: s32[4,128], index: 0, kind: input, shape index: {}]
  %s1 = inlined_call_operand.vmem [shape: f32[80,32], index: 1, kind: input, shape index: {}]
  %s2 = inlined_call_operand.vmem [shape: f32[128,32], index: 2, kind: output, shape index: {}]
  %s3 = sld [smem:[#allocation0]]
  $region18: #{temporal_embedding.1} parent=0
    _
  %s5 = ssub.s32 1, %s3
  %s6 = scalar_select 0, %s5, %s3
  // Predicated region
  $region2: #{temporal_embedding.1} parent=0 // pred_check
    _
  $region3: #{temporal_embedding.1} parent=0 // pred_check_branch
    %8 = sbr.rel (0) target = $region5
  $region4: #{temporal_embedding.1} parent=0 // pred_region
    _
  $region5: #{temporal_embedding.1} parent=0 // pred_fallthru
    _
  // Predicated region
  $region6: #{temporal_embedding.1} parent=0 // pred_check
    _
  $region7: #{temporal_embedding.1} parent=0 // pred_check_branch
    %10 = sbr.rel (0) target = $region9
  $region8: #{temporal_embedding.1} parent=0 // pred_region
    _
  $region9: #{temporal_embedding.1} parent=0 // pred_fallthru
    _
  %v11 = vlaneseq
  %v12 = vshrl.u32 %v11, 7
  %v13 = vadd.s32 %v12, 8
  %v14 = vld [vmem:[%s0] sm:$0x1]
  %v15 = vlaneseq
  %v16 = vshrl.u32 %v15, 7
  %v17 = vsub.s32 0, %v16
  %v18 = vrot.slane %v14, %v17
  %vm19 = vcmp.eq.s32.totalorder %v18, %v12
  %vm20 = vcmp.eq.s32.totalorder %v18, %v13
  %v21 = vsel %vm19, 1, 0
  %v22 = vsel %vm20, 1, 0
  %v23 = vcvt.s32.f32 %v21
  %v24 = vcvt.s32.f32 %v22
  %v25 = vadd.s32 %v12, 16
  %v26 = vadd.s32 %v12, 24
  %v27 = vld [vmem:[%s0 + $0x1] sm:$0x1]
  %v28 = vlaneseq
  %v29 = vshrl.u32 %v28, 7
  %v30 = vsub.s32 0, %v29
  %v31 = vrot.slane %v27, %v30
  %vm32 = vcmp.eq.s32.totalorder %v31, %v12
  %vm33 = vcmp.eq.s32.totalorder %v31, %v13
  %vm34 = vcmp.eq.s32.totalorder %v31, %v25
  %vm35 = vcmp.eq.s32.totalorder %v31, %v26
  %v36 = vsel %vm32, 1, 0
  %v37 = vsel %vm33, 1, 0
  %v38 = vsel %vm34, 1, 0
  %v39 = vsel %vm35, 1, 0
  %v40 = vcvt.s32.f32 %v36
  %v41 = vcvt.s32.f32 %v37
  %v42 = vcvt.s32.f32 %v38
  %v43 = vcvt.s32.f32 %v39
  %v44 = vld [vmem:[%s0 + $0x2] sm:$0x1]
  %v45 = vlaneseq
  %v46 = vshrl.u32 %v45, 7
  %v47 = vsub.s32 0, %v46
  %v48 = vrot.slane %v44, %v47
  %vm49 = vcmp.eq.s32.totalorder %v48, %v12
  %v50 = vsel %vm49, 1, 0
  %v51 = vcvt.s32.f32 %v50
  %v52 = vld [vmem:[%s0 + $0x3] sm:$0x1]
  %v53 = vlaneseq
  %v54 = vshrl.u32 %v53, 7
  %v55 = vsub.s32 0, %v54
  %v56 = vrot.slane %v52, %v55
  %vm57 = vcmp.eq.s32.totalorder %v56, %v12
  %vm58 = vcmp.eq.s32.totalorder %v56, %v13
  %vm59 = vcmp.eq.s32.totalorder %v56, %v25
  %v60 = vsel %vm57, 1, 0
  %v61 = vsel %vm58, 1, 0
  %v62 = vsel %vm59, 1, 0
  %v63 = vcvt.s32.f32 %v60
  %v64 = vcvt.s32.f32 %v61
  %v65 = vcvt.s32.f32 %v62
  %v66 = vld [vmem:[%s1] sm:$0xff]
  %v67 = vld [vmem:[%s1 + $0x8] sm:$0xff]
  %v68 = vld [vmem:[%s1 + $0x10] sm:$0xff]
  %v69 = vld [vmem:[%s1 + $0x18] sm:$0xff]
  %v70 = vld [vmem:[%s1 + $0x20] sm:$0xff]
  %v71 = vld [vmem:[%s1 + $0x28] sm:$0xff]
  %v72 = vld [vmem:[%s1 + $0x30] sm:$0xff]
  %v73 = vld [vmem:[%s1 + $0x38] sm:$0xff]
  %v74 = vld [vmem:[%s1 + $0x40] sm:$0xff]
  %v75 = vld [vmem:[%s1 + $0x48] sm:$0xff]
  %76 = vxpose.xlu0.b32.start [1/16] %v23, 128
  %77 = vxpose.xlu0.b32.cont [2/16] %v24, 128
  %78 = vxpose.xlu0.b32.cont [3/16] %v40, 128
  %79 = vxpose.xlu0.b32.cont [4/16] %v41, 128
  %80 = vxpose.xlu0.b32.cont [5/16] %v42, 128
  %81 = vxpose.xlu0.b32.cont [6/16] %v43, 128
  %82 = vxpose.xlu0.b32.cont [7/16] %v51, 128
  %83 = vxpose.xlu0.b32.cont [8/16] %v63, 128
  %84 = vxpose.xlu0.b32.cont [9/16] %v64, 128
  %85 = vxpose.xlu0.b32.cont [10/16] %v65, 128
  %86 = vxpose.xlu0.b32.cont [11/16] 0.0, 128
  %87 = vxpose.xlu0.b32.cont [12/16] 0.0, 128
  %88 = vxpose.xlu0.b32.cont [13/16] 0.0, 128
  %89 = vxpose.xlu0.b32.cont [14/16] 0.0, 128
  %90 = vxpose.xlu0.b32.cont [15/16] 0.0, 128
  %91 = vxpose.xlu0.b32.end [16/16] 0.0, 128
  %v92 = vpop.trf.xlu0
  %v93 = vpop.trf.xlu0
  %v94 = vpop.trf.xlu0
  %v95 = vpop.trf.xlu0
  %v96 = vpop.trf.xlu0
  %v97 = vpop.trf.xlu0
  %v98 = vpop.trf.xlu0
  %v99 = vpop.trf.xlu0
  %v100 = vpop.trf.xlu0
  %v101 = vpop.trf.xlu0
  %v102 = vpop.trf.xlu0
  %v103 = vpop.trf.xlu0
  %v104 = vpop.trf.xlu0
  %v105 = vpop.trf.xlu0
  %v106 = vpop.trf.xlu0
  %v107 = vpop.trf.xlu0
  %vm108 = vcmask 654336
  %v110 = vsel %vm108, %v92, 0
  %v113 = vsel %vm108, %v93, 0
  %v116 = vsel %vm108, %v94, 0
  %v119 = vsel %vm108, %v95, 0
  %v122 = vsel %vm108, %v96, 0
  %v125 = vsel %vm108, %v97, 0
  %v128 = vsel %vm108, %v98, 0
  %v131 = vsel %vm108, %v99, 0
  %v134 = vsel %vm108, %v100, 0
  %v137 = vsel %vm108, %v101, 0
  %v140 = vsel %vm108, %v102, 0
  %v143 = vsel %vm108, %v103, 0
  %v146 = vsel %vm108, %v104, 0
  %v149 = vsel %vm108, %v105, 0
  %v152 = vsel %vm108, %v106, 0
  %v155 = vsel %vm108, %v107, 0
  %157 = vmatprep.subr.mxu0 0.0
  %158 = vmatpush1.msra.mxu0 0.0
  %159 = vmatprep.subr.mxu0 0.0
  %160 = vmatpush1.msra.mxu0 0.0
  %161 = vmatprep.subr.mxu0 0.0
  %162 = vmatpush1.msra.mxu0 0.0
  %163 = vmatprep.subr.mxu0 0.0
  %164 = vmatpush1.msra.mxu0 0.0
  %165 = vmatprep.subr.mxu0 0.0
  %166 = vmatpush1.msra.mxu0 0.0
  %167 = vmatprep.subr.mxu0 0.0
  %168 = vmatpush1.msra.mxu0 0.0
  %169 = vmatprep.subr.mxu0 0.0
  %v170 = vand.u32 %v75, 4294901760
  %171 = vmatpush1.msra.mxu0 %v170
  %172 = vmatprep.subr.mxu0 0.0
  %v173 = vand.u32 %v74, 4294901760
  %174 = vmatpush1.msra.mxu0 %v173
  %175 = vmatprep.subr.mxu0 0.0
  %v176 = vand.u32 %v73, 4294901760
  %177 = vmatpush1.msra.mxu0 %v176
  %178 = vmatprep.subr.mxu0 0.0
  %v179 = vand.u32 %v72, 4294901760
  %180 = vmatpush1.msra.mxu0 %v179
  %181 = vmatprep.subr.mxu0 0.0
  %v182 = vand.u32 %v71, 4294901760
  %183 = vmatpush1.msra.mxu0 %v182
  %184 = vmatprep.subr.mxu0 0.0
  %v185 = vand.u32 %v70, 4294901760
  %186 = vmatpush1.msra.mxu0 %v185
  %187 = vmatprep.subr.mxu0 0.0
  %v188 = vand.u32 %v69, 4294901760
  %189 = vmatpush1.msra.mxu0 %v188
  %190 = vmatprep.subr.mxu0 0.0
  %v191 = vand.u32 %v68, 4294901760
  %192 = vmatpush1.msra.mxu0 %v191
  %193 = vmatprep.subr.mxu0 0.0
  %v194 = vand.u32 %v67, 4294901760
  %195 = vmatpush1.msra.mxu0 %v194
  %196 = vmatprep.subr.mxu0 0.0
  %v197 = vand.u32 %v66, 4294901760
  %198 = vmatpush1.msra.mxu0 %v197
  %199 = vmatprep.subr.mxu0 0.0
  %200 = vmatpush2.msra.mxu0 0.0
  %201 = vmatprep.subr.mxu0 0.0
  %202 = vmatpush2.msra.mxu0 0.0
  %203 = vmatprep.subr.mxu0 0.0
  %204 = vmatpush2.msra.mxu0 0.0
  %205 = vmatprep.subr.mxu0 0.0
  %206 = vmatpush2.msra.mxu0 0.0
  %207 = vmatprep.subr.mxu0 0.0
  %208 = vmatpush2.msra.mxu0 0.0
  %209 = vmatprep.subr.mxu0 0.0
  %210 = vmatpush2.msra.mxu0 0.0
  %211 = vmatprep.subr.mxu0 0.0
  %212 = vmatpush2.msra.mxu0 0.0
  %213 = vmatprep.subr.mxu0 0.0
  %214 = vmatpush2.msra.mxu0 0.0
  %215 = vmatprep.subr.mxu0 0.0
  %216 = vmatpush2.msra.mxu0 0.0
  %217 = vmatprep.subr.mxu0 0.0
  %218 = vmatpush2.msra.mxu0 0.0
  %219 = vmatprep.subr.mxu0 0.0
  %220 = vmatpush2.msra.mxu0 0.0
  %221 = vmatprep.subr.mxu0 0.0
  %222 = vmatpush2.msra.mxu0 0.0
  %223 = vmatprep.subr.mxu0 0.0
  %224 = vmatpush2.msra.mxu0 0.0
  %225 = vmatprep.subr.mxu0 0.0
  %226 = vmatpush2.msra.mxu0 0.0
  %227 = vmatprep.subr.mxu0 0.0
  %228 = vmatpush2.msra.mxu0 0.0
  %229 = vmatprep.subr.mxu0 0.0
  %230 = vmatpush2.msra.mxu0 0.0
  %231 = vmatprep.mubr.f32.mxu0 0.0
  %v232 = vand.u32 %v110, 4294901760
  %v233 = vsub.f32 %v110, %v232
  %v234 = vand.u32 %v233, 4294901760
  %v235 = vsub.f32 %v233, %v234
  %v236 = vand.u32 %v235, 4294901760
  %237 = vmatmul.mubr.f32.gmra.mxu0 %v236
  %v238 = vpop.f32.mrf.mxu0
  %v239 = vadd.f32 0.0, %v238
  %v240 = vpop.f32.mrf.mxu0
  %241 = vmatprep.mubr.f32.mxu0 0.0
  %v242 = vand.u32 %v113, 4294901760
  %v243 = vsub.f32 %v113, %v242
  %v244 = vand.u32 %v243, 4294901760
  %v245 = vsub.f32 %v243, %v244
  %v246 = vand.u32 %v245, 4294901760
  %247 = vmatmul.mubr.f32.gmra.mxu0 %v246
  %v248 = vpop.f32.mrf.mxu0
  %v249 = vadd.f32 0.0, %v248
  %v250 = vpop.f32.mrf.mxu0
  %251 = vmatprep.mubr.f32.mxu0 0.0
  %v252 = vand.u32 %v116, 4294901760
  %v253 = vsub.f32 %v116, %v252
  %v254 = vand.u32 %v253, 4294901760
  %v255 = vsub.f32 %v253, %v254
  %v256 = vand.u32 %v255, 4294901760
  %257 = vmatmul.mubr.f32.gmra.mxu0 %v256
  %v258 = vpop.f32.mrf.mxu0
  %v259 = vadd.f32 0.0, %v258
  %v260 = vpop.f32.mrf.mxu0
  %261 = vmatprep.mubr.f32.mxu0 0.0
  %v262 = vand.u32 %v119, 4294901760
  %v263 = vsub.f32 %v119, %v262
  %v264 = vand.u32 %v263, 4294901760
  %v265 = vsub.f32 %v263, %v264
  %v266 = vand.u32 %v265, 4294901760
  %267 = vmatmul.mubr.f32.gmra.mxu0 %v266
  %v268 = vpop.f32.mrf.mxu0
  %v269 = vadd.f32 0.0, %v268
  %v270 = vpop.f32.mrf.mxu0
  %271 = vmatprep.mubr.f32.mxu0 0.0
  %v272 = vand.u32 %v122, 4294901760
  %v273 = vsub.f32 %v122, %v272
  %v274 = vand.u32 %v273, 4294901760
  %v275 = vsub.f32 %v273, %v274
  %v276 = vand.u32 %v275, 4294901760
  %277 = vmatmul.mubr.f32.gmra.mxu0 %v276
  %v278 = vpop.f32.mrf.mxu0
  %v279 = vadd.f32 0.0, %v278
  %v280 = vpop.f32.mrf.mxu0
  %281 = vmatprep.mubr.f32.mxu0 0.0
  %v282 = vand.u32 %v125, 4294901760
  %v283 = vsub.f32 %v125, %v282
  %v284 = vand.u32 %v283, 4294901760
  %v285 = vsub.f32 %v283, %v284
  %v286 = vand.u32 %v285, 4294901760
  %287 = vmatmul.mubr.f32.gmra.mxu0 %v286
  %v288 = vpop.f32.mrf.mxu0
  %v289 = vadd.f32 0.0, %v288
  %v290 = vpop.f32.mrf.mxu0
  %291 = vmatprep.mubr.f32.mxu0 0.0
  %v292 = vand.u32 %v128, 4294901760
  %v293 = vsub.f32 %v128, %v292
  %v294 = vand.u32 %v293, 4294901760
  %v295 = vsub.f32 %v293, %v294
  %v296 = vand.u32 %v295, 4294901760
  %297 = vmatmul.mubr.f32.gmra.mxu0 %v296
  %v298 = vpop.f32.mrf.mxu0
  %v299 = vadd.f32 0.0, %v298
  %v300 = vpop.f32.mrf.mxu0
  %301 = vmatprep.mubr.f32.mxu0 0.0
  %v302 = vand.u32 %v131, 4294901760
  %v303 = vsub.f32 %v131, %v302
  %v304 = vand.u32 %v303, 4294901760
  %v305 = vsub.f32 %v303, %v304
  %v306 = vand.u32 %v305, 4294901760
  %307 = vmatmul.mubr.f32.gmra.mxu0 %v306
  %v308 = vpop.f32.mrf.mxu0
  %v309 = vadd.f32 0.0, %v308
  %v310 = vpop.f32.mrf.mxu0
  %311 = vmatprep.mubr.f32.mxu0 0.0
  %v312 = vand.u32 %v134, 4294901760
  %v313 = vsub.f32 %v134, %v312
  %v314 = vand.u32 %v313, 4294901760
  %v315 = vsub.f32 %v313, %v314
  %v316 = vand.u32 %v315, 4294901760
  %317 = vmatmul.mubr.f32.gmra.mxu0 %v316
  %v318 = vpop.f32.mrf.mxu0
  %v319 = vadd.f32 0.0, %v318
  %v320 = vpop.f32.mrf.mxu0
  %321 = vmatprep.mubr.f32.mxu0 0.0
  %v322 = vand.u32 %v137, 4294901760
  %v323 = vsub.f32 %v137, %v322
  %v324 = vand.u32 %v323, 4294901760
  %v325 = vsub.f32 %v323, %v324
  %v326 = vand.u32 %v325, 4294901760
  %327 = vmatmul.mubr.f32.gmra.mxu0 %v326
  %v328 = vpop.f32.mrf.mxu0
  %v329 = vadd.f32 0.0, %v328
  %v330 = vpop.f32.mrf.mxu0
  %331 = vmatprep.mubr.f32.mxu0 0.0
  %v332 = vand.u32 %v140, 4294901760
  %v333 = vsub.f32 %v140, %v332
  %v334 = vand.u32 %v333, 4294901760
  %v335 = vsub.f32 %v333, %v334
  %v336 = vand.u32 %v335, 4294901760
  %337 = vmatmul.mubr.f32.gmra.mxu0 %v336
  %v338 = vpop.f32.mrf.mxu0
  %v339 = vadd.f32 0.0, %v338
  %v340 = vpop.f32.mrf.mxu0
  %341 = vmatprep.mubr.f32.mxu0 0.0
  %v342 = vand.u32 %v143, 4294901760
  %v343 = vsub.f32 %v143, %v342
  %v344 = vand.u32 %v343, 4294901760
  %v345 = vsub.f32 %v343, %v344
  %v346 = vand.u32 %v345, 4294901760
  %347 = vmatmul.mubr.f32.gmra.mxu0 %v346
  %v348 = vpop.f32.mrf.mxu0
  %v349 = vadd.f32 0.0, %v348
  %v350 = vpop.f32.mrf.mxu0
  %351 = vmatprep.mubr.f32.mxu0 0.0
  %v352 = vand.u32 %v146, 4294901760
  %v353 = vsub.f32 %v146, %v352
  %v354 = vand.u32 %v353, 4294901760
  %v355 = vsub.f32 %v353, %v354
  %v356 = vand.u32 %v355, 4294901760
  %357 = vmatmul.mubr.f32.gmra.mxu0 %v356
  %v358 = vpop.f32.mrf.mxu0
  %v359 = vadd.f32 0.0, %v358
  %v360 = vpop.f32.mrf.mxu0
  %361 = vmatprep.mubr.f32.mxu0 0.0
  %v362 = vand.u32 %v149, 4294901760
  %v363 = vsub.f32 %v149, %v362
  %v364 = vand.u32 %v363, 4294901760
  %v365 = vsub.f32 %v363, %v364
  %v366 = vand.u32 %v365, 4294901760
  %367 = vmatmul.mubr.f32.gmra.mxu0 %v366
  %v368 = vpop.f32.mrf.mxu0
  %v369 = vadd.f32 0.0, %v368
  %v370 = vpop.f32.mrf.mxu0
  %371 = vmatprep.mubr.f32.mxu0 0.0
  %v372 = vand.u32 %v152, 4294901760
  %v373 = vsub.f32 %v152, %v372
  %v374 = vand.u32 %v373, 4294901760
  %v375 = vsub.f32 %v373, %v374
  %v376 = vand.u32 %v375, 4294901760
  %377 = vmatmul.mubr.f32.gmra.mxu0 %v376
  %v378 = vpop.f32.mrf.mxu0
  %v379 = vadd.f32 0.0, %v378
  %v380 = vpop.f32.mrf.mxu0
  %381 = vmatprep.mubr.f32.mxu0 0.0
  %v382 = vand.u32 %v155, 4294901760
  %v383 = vsub.f32 %v155, %v382
  %v384 = vand.u32 %v383, 4294901760
  %v385 = vsub.f32 %v383, %v384
  %v386 = vand.u32 %v385, 4294901760
  %387 = vmatmul.mubr.f32.gmra.mxu0 %v386
  %v388 = vpop.f32.mrf.mxu0
  %v389 = vadd.f32 0.0, %v388
  %v390 = vpop.f32.mrf.mxu0
  %391 = vdwg.mxu0
  %392 = vmatprep.subr.mxu0 0.0
  %393 = vmatpush1.msra.mxu0 0.0
  %394 = vmatprep.subr.mxu0 0.0
  %395 = vmatpush1.msra.mxu0 0.0
  %396 = vmatprep.subr.mxu0 0.0
  %397 = vmatpush1.msra.mxu0 0.0
  %398 = vmatprep.subr.mxu0 0.0
  %399 = vmatpush1.msra.mxu0 0.0
  %400 = vmatprep.subr.mxu0 0.0
  %401 = vmatpush1.msra.mxu0 0.0
  %402 = vmatprep.subr.mxu0 0.0
  %403 = vmatpush1.msra.mxu0 0.0
  %404 = vmatprep.subr.mxu0 0.0
  %v405 = vand.u32 %v75, 4294901760
  %v406 = vsub.f32 %v75, %v405
  %v407 = vand.u32 %v406, 4294901760
  %v408 = vsub.f32 %v406, %v407
  %v409 = vand.u32 %v408, 4294901760
  %410 = vmatpush1.msra.mxu0 %v409
  %411 = vmatprep.subr.mxu0 0.0
  %v412 = vand.u32 %v74, 4294901760
  %v413 = vsub.f32 %v74, %v412
  %v414 = vand.u32 %v413, 4294901760
  %v415 = vsub.f32 %v413, %v414
  %v416 = vand.u32 %v415, 4294901760
  %417 = vmatpush1.msra.mxu0 %v416
  %418 = vmatprep.subr.mxu0 0.0
  %v419 = vand.u32 %v73, 4294901760
  %v420 = vsub.f32 %v73, %v419
  %v421 = vand.u32 %v420, 4294901760
  %v422 = vsub.f32 %v420, %v421
  %v423 = vand.u32 %v422, 4294901760
  %424 = vmatpush1.msra.mxu0 %v423
  %425 = vmatprep.subr.mxu0 0.0
  %v426 = vand.u32 %v72, 4294901760
  %v427 = vsub.f32 %v72, %v426
  %v428 = vand.u32 %v427, 4294901760
  %v429 = vsub.f32 %v427, %v428
  %v430 = vand.u32 %v429, 4294901760
  %431 = vmatpush1.msra.mxu0 %v430
  %432 = vmatprep.subr.mxu0 0.0
  %v433 = vand.u32 %v71, 4294901760
  %v434 = vsub.f32 %v71, %v433
  %v435 = vand.u32 %v434, 4294901760
  %v436 = vsub.f32 %v434, %v435
  %v437 = vand.u32 %v436, 4294901760
  %438 = vmatpush1.msra.mxu0 %v437
  %439 = vmatprep.subr.mxu0 0.0
  %v440 = vand.u32 %v70, 4294901760
  %v441 = vsub.f32 %v70, %v440
  %v442 = vand.u32 %v441, 4294901760
  %v443 = vsub.f32 %v441, %v442
  %v444 = vand.u32 %v443, 4294901760
  %445 = vmatpush1.msra.mxu0 %v444
  %446 = vmatprep.subr.mxu0 0.0
  %v447 = vand.u32 %v69, 4294901760
  %v448 = vsub.f32 %v69, %v447
  %v449 = vand.u32 %v448, 4294901760
  %v450 = vsub.f32 %v448, %v449
  %v451 = vand.u32 %v450, 4294901760
  %452 = vmatpush1.msra.mxu0 %v451
  %453 = vmatprep.subr.mxu0 0.0
  %v454 = vand.u32 %v68, 4294901760
  %v455 = vsub.f32 %v68, %v454
  %v456 = vand.u32 %v455, 4294901760
  %v457 = vsub.f32 %v455, %v456
  %v458 = vand.u32 %v457, 4294901760
  %459 = vmatpush1.msra.mxu0 %v458
  %460 = vmatprep.subr.mxu0 0.0
  %v461 = vand.u32 %v67, 4294901760
  %v462 = vsub.f32 %v67, %v461
  %v463 = vand.u32 %v462, 4294901760
  %v464 = vsub.f32 %v462, %v463
  %v465 = vand.u32 %v464, 4294901760
  %466 = vmatpush1.msra.mxu0 %v465
  %467 = vmatprep.subr.mxu0 0.0
  %v468 = vand.u32 %v66, 4294901760
  %v469 = vsub.f32 %v66, %v468
  %v470 = vand.u32 %v469, 4294901760
  %v471 = vsub.f32 %v469, %v470
  %v472 = vand.u32 %v471, 4294901760
  %473 = vmatpush1.msra.mxu0 %v472
  %474 = vmatprep.subr.mxu0 0.0
  %475 = vmatpush2.msra.mxu0 0.0
  %476 = vmatprep.subr.mxu0 0.0
  %477 = vmatpush2.msra.mxu0 0.0
  %478 = vmatprep.subr.mxu0 0.0
  %479 = vmatpush2.msra.mxu0 0.0
  %480 = vmatprep.subr.mxu0 0.0
  %481 = vmatpush2.msra.mxu0 0.0
  %482 = vmatprep.subr.mxu0 0.0
  %483 = vmatpush2.msra.mxu0 0.0
  %484 = vmatprep.subr.mxu0 0.0
  %485 = vmatpush2.msra.mxu0 0.0
  %486 = vmatprep.subr.mxu0 0.0
  %487 = vmatpush2.msra.mxu0 0.0
  %488 = vmatprep.subr.mxu0 0.0
  %489 = vmatpush2.msra.mxu0 0.0
  %490 = vmatprep.subr.mxu0 0.0
  %491 = vmatpush2.msra.mxu0 0.0
  %492 = vmatprep.subr.mxu0 0.0
  %493 = vmatpush2.msra.mxu0 0.0
  %494 = vmatprep.subr.mxu0 0.0
  %495 = vmatpush2.msra.mxu0 0.0
  %496 = vmatprep.subr.mxu0 0.0
  %497 = vmatpush2.msra.mxu0 0.0
  %498 = vmatprep.subr.mxu0 0.0
  %499 = vmatpush2.msra.mxu0 0.0
  %500 = vmatprep.subr.mxu0 0.0
  %501 = vmatpush2.msra.mxu0 0.0
  %502 = vmatprep.subr.mxu0 0.0
  %503 = vmatpush2.msra.mxu0 0.0
  %504 = vmatprep.subr.mxu0 0.0
  %505 = vmatpush2.msra.mxu0 0.0
  %506 = vmatprep.mubr.f32.mxu0 0.0
  %v507 = vand.u32 %v110, 4294901760
  %508 = vmatmul.mubr.f32.gmra.mxu0 %v507
  %v509 = vpop.f32.mrf.mxu0
  %v510 = vadd.f32 %v239, %v509
  %v511 = vpop.f32.mrf.mxu0
  %512 = vmatprep.mubr.f32.mxu0 0.0
  %v513 = vand.u32 %v113, 4294901760
  %514 = vmatmul.mubr.f32.gmra.mxu0 %v513
  %v515 = vpop.f32.mrf.mxu0
  %v516 = vadd.f32 %v249, %v515
  %v517 = vpop.f32.mrf.mxu0
  %518 = vmatprep.mubr.f32.mxu0 0.0
  %v519 = vand.u32 %v116, 4294901760
  %520 = vmatmul.mubr.f32.gmra.mxu0 %v519
  %v521 = vpop.f32.mrf.mxu0
  %v522 = vadd.f32 %v259, %v521
  %v523 = vpop.f32.mrf.mxu0
  %524 = vmatprep.mubr.f32.mxu0 0.0
  %v525 = vand.u32 %v119, 4294901760
  %526 = vmatmul.mubr.f32.gmra.mxu0 %v525
  %v527 = vpop.f32.mrf.mxu0
  %v528 = vadd.f32 %v269, %v527
  %v529 = vpop.f32.mrf.mxu0
  %530 = vmatprep.mubr.f32.mxu0 0.0
  %v531 = vand.u32 %v122, 4294901760
  %532 = vmatmul.mubr.f32.gmra.mxu0 %v531
  %v533 = vpop.f32.mrf.mxu0
  %v534 = vadd.f32 %v279, %v533
  %v535 = vpop.f32.mrf.mxu0
  %536 = vmatprep.mubr.f32.mxu0 0.0
  %v537 = vand.u32 %v125, 4294901760
  %538 = vmatmul.mubr.f32.gmra.mxu0 %v537
  %v539 = vpop.f32.mrf.mxu0
  %v540 = vadd.f32 %v289, %v539
  %v541 = vpop.f32.mrf.mxu0
  %542 = vmatprep.mubr.f32.mxu0 0.0
  %v543 = vand.u32 %v128, 4294901760
  %544 = vmatmul.mubr.f32.gmra.mxu0 %v543
  %v545 = vpop.f32.mrf.mxu0
  %v546 = vadd.f32 %v299, %v545
  %v547 = vpop.f32.mrf.mxu0
  %548 = vmatprep.mubr.f32.mxu0 0.0
  %v549 = vand.u32 %v131, 4294901760
  %550 = vmatmul.mubr.f32.gmra.mxu0 %v549
  %v551 = vpop.f32.mrf.mxu0
  %v552 = vadd.f32 %v309, %v551
  %v553 = vpop.f32.mrf.mxu0
  %554 = vmatprep.mubr.f32.mxu0 0.0
  %v555 = vand.u32 %v134, 4294901760
  %556 = vmatmul.mubr.f32.gmra.mxu0 %v555
  %v557 = vpop.f32.mrf.mxu0
  %v558 = vadd.f32 %v319, %v557
  %v559 = vpop.f32.mrf.mxu0
  %560 = vmatprep.mubr.f32.mxu0 0.0
  %v561 = vand.u32 %v137, 4294901760
  %562 = vmatmul.mubr.f32.gmra.mxu0 %v561
  %v563 = vpop.f32.mrf.mxu0
  %v564 = vadd.f32 %v329, %v563
  %v565 = vpop.f32.mrf.mxu0
  %566 = vmatprep.mubr.f32.mxu0 0.0
  %v567 = vand.u32 %v140, 4294901760
  %568 = vmatmul.mubr.f32.gmra.mxu0 %v567
  %v569 = vpop.f32.mrf.mxu0
  %v570 = vadd.f32 %v339, %v569
  %v571 = vpop.f32.mrf.mxu0
  %572 = vmatprep.mubr.f32.mxu0 0.0
  %v573 = vand.u32 %v143, 4294901760
  %574 = vmatmul.mubr.f32.gmra.mxu0 %v573
  %v575 = vpop.f32.mrf.mxu0
  %v576 = vadd.f32 %v349, %v575
  %v577 = vpop.f32.mrf.mxu0
  %578 = vmatprep.mubr.f32.mxu0 0.0
  %v579 = vand.u32 %v146, 4294901760
  %580 = vmatmul.mubr.f32.gmra.mxu0 %v579
  %v581 = vpop.f32.mrf.mxu0
  %v582 = vadd.f32 %v359, %v581
  %v583 = vpop.f32.mrf.mxu0
  %584 = vmatprep.mubr.f32.mxu0 0.0
  %v585 = vand.u32 %v149, 4294901760
  %586 = vmatmul.mubr.f32.gmra.mxu0 %v585
  %v587 = vpop.f32.mrf.mxu0
  %v588 = vadd.f32 %v369, %v587
  %v589 = vpop.f32.mrf.mxu0
  %590 = vmatprep.mubr.f32.mxu0 0.0
  %v591 = vand.u32 %v152, 4294901760
  %592 = vmatmul.mubr.f32.gmra.mxu0 %v591
  %v593 = vpop.f32.mrf.mxu0
  %v594 = vadd.f32 %v379, %v593
  %v595 = vpop.f32.mrf.mxu0
  %596 = vmatprep.mubr.f32.mxu0 0.0
  %v597 = vand.u32 %v155, 4294901760
  %598 = vmatmul.mubr.f32.gmra.mxu0 %v597
  %v599 = vpop.f32.mrf.mxu0
  %v600 = vadd.f32 %v389, %v599
  %v601 = vpop.f32.mrf.mxu0
  %602 = vdwg.mxu0
  %603 = vmatprep.subr.mxu0 0.0
  %604 = vmatpush1.msra.mxu0 0.0
  %605 = vmatprep.subr.mxu0 0.0
  %606 = vmatpush1.msra.mxu0 0.0
  %607 = vmatprep.subr.mxu0 0.0
  %608 = vmatpush1.msra.mxu0 0.0
  %609 = vmatprep.subr.mxu0 0.0
  %610 = vmatpush1.msra.mxu0 0.0
  %611 = vmatprep.subr.mxu0 0.0
  %612 = vmatpush1.msra.mxu0 0.0
  %613 = vmatprep.subr.mxu0 0.0
  %614 = vmatpush1.msra.mxu0 0.0
  %615 = vmatprep.subr.mxu0 0.0
  %v616 = vand.u32 %v75, 4294901760
  %v617 = vsub.f32 %v75, %v616
  %618 = vmatpush1.msra.mxu0 %v617
  %619 = vmatprep.subr.mxu0 0.0
  %v620 = vand.u32 %v74, 4294901760
  %v621 = vsub.f32 %v74, %v620
  %622 = vmatpush1.msra.mxu0 %v621
  %623 = vmatprep.subr.mxu0 0.0
  %v624 = vand.u32 %v73, 4294901760
  %v625 = vsub.f32 %v73, %v624
  %626 = vmatpush1.msra.mxu0 %v625
  %627 = vmatprep.subr.mxu0 0.0
  %v628 = vand.u32 %v72, 4294901760
  %v629 = vsub.f32 %v72, %v628
  %630 = vmatpush1.msra.mxu0 %v629
  %631 = vmatprep.subr.mxu0 0.0
  %v632 = vand.u32 %v71, 4294901760
  %v633 = vsub.f32 %v71, %v632
  %634 = vmatpush1.msra.mxu0 %v633
  %635 = vmatprep.subr.mxu0 0.0
  %v636 = vand.u32 %v70, 4294901760
  %v637 = vsub.f32 %v70, %v636
  %638 = vmatpush1.msra.mxu0 %v637
  %639 = vmatprep.subr.mxu0 0.0
  %v640 = vand.u32 %v69, 4294901760
  %v641 = vsub.f32 %v69, %v640
  %642 = vmatpush1.msra.mxu0 %v641
  %643 = vmatprep.subr.mxu0 0.0
  %v644 = vand.u32 %v68, 4294901760
  %v645 = vsub.f32 %v68, %v644
  %646 = vmatpush1.msra.mxu0 %v645
  %647 = vmatprep.subr.mxu0 0.0
  %v648 = vand.u32 %v67, 4294901760
  %v649 = vsub.f32 %v67, %v648
  %650 = vmatpush1.msra.mxu0 %v649
  %651 = vmatprep.subr.mxu0 0.0
  %v652 = vand.u32 %v66, 4294901760
  %v653 = vsub.f32 %v66, %v652
  %654 = vmatpush1.msra.mxu0 %v653
  %655 = vmatprep.subr.mxu0 0.0
  %656 = vmatpush2.msra.mxu0 0.0
  %657 = vmatprep.subr.mxu0 0.0
  %658 = vmatpush2.msra.mxu0 0.0
  %659 = vmatprep.subr.mxu0 0.0
  %660 = vmatpush2.msra.mxu0 0.0
  %661 = vmatprep.subr.mxu0 0.0
  %662 = vmatpush2.msra.mxu0 0.0
  %663 = vmatprep.subr.mxu0 0.0
  %664 = vmatpush2.msra.mxu0 0.0
  %665 = vmatprep.subr.mxu0 0.0
  %666 = vmatpush2.msra.mxu0 0.0
  %667 = vmatprep.subr.mxu0 0.0
  %668 = vmatpush2.msra.mxu0 0.0
  %669 = vmatprep.subr.mxu0 0.0
  %670 = vmatpush2.msra.mxu0 0.0
  %671 = vmatprep.subr.mxu0 0.0
  %672 = vmatpush2.msra.mxu0 0.0
  %673 = vmatprep.subr.mxu0 0.0
  %674 = vmatpush2.msra.mxu0 0.0
  %675 = vmatprep.subr.mxu0 0.0
  %676 = vmatpush2.msra.mxu0 0.0
  %677 = vmatprep.subr.mxu0 0.0
  %678 = vmatpush2.msra.mxu0 0.0
  %679 = vmatprep.subr.mxu0 0.0
  %680 = vmatpush2.msra.mxu0 0.0
  %681 = vmatprep.subr.mxu0 0.0
  %682 = vmatpush2.msra.mxu0 0.0
  %683 = vmatprep.subr.mxu0 0.0
  %684 = vmatpush2.msra.mxu0 0.0
  %685 = vmatprep.subr.mxu0 0.0
  %686 = vmatpush2.msra.mxu0 0.0
  %687 = vmatprep.mubr.f32.mxu0 0.0
  %v688 = vand.u32 %v110, 4294901760
  %v689 = vsub.f32 %v110, %v688
  %690 = vmatmul.mubr.f32.gmra.mxu0 %v689
  %v691 = vpop.f32.mrf.mxu0
  %v692 = vadd.f32 %v510, %v691
  %v693 = vpop.f32.mrf.mxu0
  %694 = vmatprep.mubr.f32.mxu0 0.0
  %v695 = vand.u32 %v113, 4294901760
  %v696 = vsub.f32 %v113, %v695
  %697 = vmatmul.mubr.f32.gmra.mxu0 %v696
  %v698 = vpop.f32.mrf.mxu0
  %v699 = vadd.f32 %v516, %v698
  %v700 = vpop.f32.mrf.mxu0
  %701 = vmatprep.mubr.f32.mxu0 0.0
  %v702 = vand.u32 %v116, 4294901760
  %v703 = vsub.f32 %v116, %v702
  %704 = vmatmul.mubr.f32.gmra.mxu0 %v703
  %v705 = vpop.f32.mrf.mxu0
  %v706 = vadd.f32 %v522, %v705
  %v707 = vpop.f32.mrf.mxu0
  %708 = vmatprep.mubr.f32.mxu0 0.0
  %v709 = vand.u32 %v119, 4294901760
  %v710 = vsub.f32 %v119, %v709
  %711 = vmatmul.mubr.f32.gmra.mxu0 %v710
  %v712 = vpop.f32.mrf.mxu0
  %v713 = vadd.f32 %v528, %v712
  %v714 = vpop.f32.mrf.mxu0
  %715 = vmatprep.mubr.f32.mxu0 0.0
  %v716 = vand.u32 %v122, 4294901760
  %v717 = vsub.f32 %v122, %v716
  %718 = vmatmul.mubr.f32.gmra.mxu0 %v717
  %v719 = vpop.f32.mrf.mxu0
  %v720 = vadd.f32 %v534, %v719
  %v721 = vpop.f32.mrf.mxu0
  %722 = vmatprep.mubr.f32.mxu0 0.0
  %v723 = vand.u32 %v125, 4294901760
  %v724 = vsub.f32 %v125, %v723
  %725 = vmatmul.mubr.f32.gmra.mxu0 %v724
  %v726 = vpop.f32.mrf.mxu0
  %v727 = vadd.f32 %v540, %v726
  %v728 = vpop.f32.mrf.mxu0
  %729 = vmatprep.mubr.f32.mxu0 0.0
  %v730 = vand.u32 %v128, 4294901760
  %v731 = vsub.f32 %v128, %v730
  %732 = vmatmul.mubr.f32.gmra.mxu0 %v731
  %v733 = vpop.f32.mrf.mxu0
  %v734 = vadd.f32 %v546, %v733
  %v735 = vpop.f32.mrf.mxu0
  %736 = vmatprep.mubr.f32.mxu0 0.0
  %v737 = vand.u32 %v131, 4294901760
  %v738 = vsub.f32 %v131, %v737
  %739 = vmatmul.mubr.f32.gmra.mxu0 %v738
  %v740 = vpop.f32.mrf.mxu0
  %v741 = vadd.f32 %v552, %v740
  %v742 = vpop.f32.mrf.mxu0
  %743 = vmatprep.mubr.f32.mxu0 0.0
  %v744 = vand.u32 %v134, 4294901760
  %v745 = vsub.f32 %v134, %v744
  %746 = vmatmul.mubr.f32.gmra.mxu0 %v745
  %v747 = vpop.f32.mrf.mxu0
  %v748 = vadd.f32 %v558, %v747
  %v749 = vpop.f32.mrf.mxu0
  %750 = vmatprep.mubr.f32.mxu0 0.0
  %v751 = vand.u32 %v137, 4294901760
  %v752 = vsub.f32 %v137, %v751
  %753 = vmatmul.mubr.f32.gmra.mxu0 %v752
  %v754 = vpop.f32.mrf.mxu0
  %v755 = vadd.f32 %v564, %v754
  %v756 = vpop.f32.mrf.mxu0
  %757 = vmatprep.mubr.f32.mxu0 0.0
  %v758 = vand.u32 %v140, 4294901760
  %v759 = vsub.f32 %v140, %v758
  %760 = vmatmul.mubr.f32.gmra.mxu0 %v759
  %v761 = vpop.f32.mrf.mxu0
  %v762 = vadd.f32 %v570, %v761
  %v763 = vpop.f32.mrf.mxu0
  %764 = vmatprep.mubr.f32.mxu0 0.0
  %v765 = vand.u32 %v143, 4294901760
  %v766 = vsub.f32 %v143, %v765
  %767 = vmatmul.mubr.f32.gmra.mxu0 %v766
  %v768 = vpop.f32.mrf.mxu0
  %v769 = vadd.f32 %v576, %v768
  %v770 = vpop.f32.mrf.mxu0
  %771 = vmatprep.mubr.f32.mxu0 0.0
  %v772 = vand.u32 %v146, 4294901760
  %v773 = vsub.f32 %v146, %v772
  %774 = vmatmul.mubr.f32.gmra.mxu0 %v773
  %v775 = vpop.f32.mrf.mxu0
  %v776 = vadd.f32 %v582, %v775
  %v777 = vpop.f32.mrf.mxu0
  %778 = vmatprep.mubr.f32.mxu0 0.0
  %v779 = vand.u32 %v149, 4294901760
  %v780 = vsub.f32 %v149, %v779
  %781 = vmatmul.mubr.f32.gmra.mxu0 %v780
  %v782 = vpop.f32.mrf.mxu0
  %v783 = vadd.f32 %v588, %v782
  %v784 = vpop.f32.mrf.mxu0
  %785 = vmatprep.mubr.f32.mxu0 0.0
  %v786 = vand.u32 %v152, 4294901760
  %v787 = vsub.f32 %v152, %v786
  %788 = vmatmul.mubr.f32.gmra.mxu0 %v787
  %v789 = vpop.f32.mrf.mxu0
  %v790 = vadd.f32 %v594, %v789
  %v791 = vpop.f32.mrf.mxu0
  %792 = vmatprep.mubr.f32.mxu0 0.0
  %v793 = vand.u32 %v155, 4294901760
  %v794 = vsub.f32 %v155, %v793
  %795 = vmatmul.mubr.f32.gmra.mxu0 %v794
  %v796 = vpop.f32.mrf.mxu0
  %v797 = vadd.f32 %v600, %v796
  %v798 = vpop.f32.mrf.mxu0
  %799 = vdwg.mxu0
  %800 = vmatprep.subr.mxu0 0.0
  %801 = vmatpush1.msra.mxu0 0.0
  %802 = vmatprep.subr.mxu0 0.0
  %803 = vmatpush1.msra.mxu0 0.0
  %804 = vmatprep.subr.mxu0 0.0
  %805 = vmatpush1.msra.mxu0 0.0
  %806 = vmatprep.subr.mxu0 0.0
  %807 = vmatpush1.msra.mxu0 0.0
  %808 = vmatprep.subr.mxu0 0.0
  %809 = vmatpush1.msra.mxu0 0.0
  %810 = vmatprep.subr.mxu0 0.0
  %811 = vmatpush1.msra.mxu0 0.0
  %812 = vmatprep.subr.mxu0 0.0
  %v813 = vand.u32 %v75, 4294901760
  %814 = vmatpush1.msra.mxu0 %v813
  %815 = vmatprep.subr.mxu0 0.0
  %v816 = vand.u32 %v74, 4294901760
  %817 = vmatpush1.msra.mxu0 %v816
  %818 = vmatprep.subr.mxu0 0.0
  %v819 = vand.u32 %v73, 4294901760
  %820 = vmatpush1.msra.mxu0 %v819
  %821 = vmatprep.subr.mxu0 0.0
  %v822 = vand.u32 %v72, 4294901760
  %823 = vmatpush1.msra.mxu0 %v822
  %824 = vmatprep.subr.mxu0 0.0
  %v825 = vand.u32 %v71, 4294901760
  %826 = vmatpush1.msra.mxu0 %v825
  %827 = vmatprep.subr.mxu0 0.0
  %v828 = vand.u32 %v70, 4294901760
  %829 = vmatpush1.msra.mxu0 %v828
  %830 = vmatprep.subr.mxu0 0.0
  %v831 = vand.u32 %v69, 4294901760
  %832 = vmatpush1.msra.mxu0 %v831
  %833 = vmatprep.subr.mxu0 0.0
  %v834 = vand.u32 %v68, 4294901760
  %835 = vmatpush1.msra.mxu0 %v834
  %836 = vmatprep.subr.mxu0 0.0
  %v837 = vand.u32 %v67, 4294901760
  %838 = vmatpush1.msra.mxu0 %v837
  %839 = vmatprep.subr.mxu0 0.0
  %v840 = vand.u32 %v66, 4294901760
  %841 = vmatpush1.msra.mxu0 %v840
  %842 = vmatprep.subr.mxu0 0.0
  %843 = vmatpush2.msra.mxu0 0.0
  %844 = vmatprep.subr.mxu0 0.0
  %845 = vmatpush2.msra.mxu0 0.0
  %846 = vmatprep.subr.mxu0 0.0
  %847 = vmatpush2.msra.mxu0 0.0
  %848 = vmatprep.subr.mxu0 0.0
  %849 = vmatpush2.msra.mxu0 0.0
  %850 = vmatprep.subr.mxu0 0.0
  %851 = vmatpush2.msra.mxu0 0.0
  %852 = vmatprep.subr.mxu0 0.0
  %853 = vmatpush2.msra.mxu0 0.0
  %854 = vmatprep.subr.mxu0 0.0
  %855 = vmatpush2.msra.mxu0 0.0
  %856 = vmatprep.subr.mxu0 0.0
  %857 = vmatpush2.msra.mxu0 0.0
  %858 = vmatprep.subr.mxu0 0.0
  %859 = vmatpush2.msra.mxu0 0.0
  %860 = vmatprep.subr.mxu0 0.0
  %861 = vmatpush2.msra.mxu0 0.0
  %862 = vmatprep.subr.mxu0 0.0
  %863 = vmatpush2.msra.mxu0 0.0
  %864 = vmatprep.subr.mxu0 0.0
  %865 = vmatpush2.msra.mxu0 0.0
  %866 = vmatprep.subr.mxu0 0.0
  %867 = vmatpush2.msra.mxu0 0.0
  %868 = vmatprep.subr.mxu0 0.0
  %869 = vmatpush2.msra.mxu0 0.0
  %870 = vmatprep.subr.mxu0 0.0
  %871 = vmatpush2.msra.mxu0 0.0
  %872 = vmatprep.subr.mxu0 0.0
  %873 = vmatpush2.msra.mxu0 0.0
  %874 = vmatprep.mubr.f32.mxu0 0.0
  %v875 = vand.u32 %v110, 4294901760
  %v876 = vsub.f32 %v110, %v875
  %v877 = vand.u32 %v876, 4294901760
  %878 = vmatmul.mubr.f32.gmra.mxu0 %v877
  %v879 = vpop.f32.mrf.mxu0
  %v880 = vadd.f32 %v692, %v879
  %v881 = vpop.f32.mrf.mxu0
  %882 = vmatprep.mubr.f32.mxu0 0.0
  %v883 = vand.u32 %v113, 4294901760
  %v884 = vsub.f32 %v113, %v883
  %v885 = vand.u32 %v884, 4294901760
  %886 = vmatmul.mubr.f32.gmra.mxu0 %v885
  %v887 = vpop.f32.mrf.mxu0
  %v888 = vadd.f32 %v699, %v887
  %v889 = vpop.f32.mrf.mxu0
  %890 = vmatprep.mubr.f32.mxu0 0.0
  %v891 = vand.u32 %v116, 4294901760
  %v892 = vsub.f32 %v116, %v891
  %v893 = vand.u32 %v892, 4294901760
  %894 = vmatmul.mubr.f32.gmra.mxu0 %v893
  %v895 = vpop.f32.mrf.mxu0
  %v896 = vadd.f32 %v706, %v895
  %v897 = vpop.f32.mrf.mxu0
  %898 = vmatprep.mubr.f32.mxu0 0.0
  %v899 = vand.u32 %v119, 4294901760
  %v900 = vsub.f32 %v119, %v899
  %v901 = vand.u32 %v900, 4294901760
  %902 = vmatmul.mubr.f32.gmra.mxu0 %v901
  %v903 = vpop.f32.mrf.mxu0
  %v904 = vadd.f32 %v713, %v903
  %v905 = vpop.f32.mrf.mxu0
  %906 = vmatprep.mubr.f32.mxu0 0.0
  %v907 = vand.u32 %v122, 4294901760
  %v908 = vsub.f32 %v122, %v907
  %v909 = vand.u32 %v908, 4294901760
  %910 = vmatmul.mubr.f32.gmra.mxu0 %v909
  %v911 = vpop.f32.mrf.mxu0
  %v912 = vadd.f32 %v720, %v911
  %v913 = vpop.f32.mrf.mxu0
  %914 = vmatprep.mubr.f32.mxu0 0.0
  %v915 = vand.u32 %v125, 4294901760
  %v916 = vsub.f32 %v125, %v915
  %v917 = vand.u32 %v916, 4294901760
  %918 = vmatmul.mubr.f32.gmra.mxu0 %v917
  %v919 = vpop.f32.mrf.mxu0
  %v920 = vadd.f32 %v727, %v919
  %v921 = vpop.f32.mrf.mxu0
  %922 = vmatprep.mubr.f32.mxu0 0.0
  %v923 = vand.u32 %v128, 4294901760
  %v924 = vsub.f32 %v128, %v923
  %v925 = vand.u32 %v924, 4294901760
  %926 = vmatmul.mubr.f32.gmra.mxu0 %v925
  %v927 = vpop.f32.mrf.mxu0
  %v928 = vadd.f32 %v734, %v927
  %v929 = vpop.f32.mrf.mxu0
  %930 = vmatprep.mubr.f32.mxu0 0.0
  %v931 = vand.u32 %v131, 4294901760
  %v932 = vsub.f32 %v131, %v931
  %v933 = vand.u32 %v932, 4294901760
  %934 = vmatmul.mubr.f32.gmra.mxu0 %v933
  %v935 = vpop.f32.mrf.mxu0
  %v936 = vadd.f32 %v741, %v935
  %v937 = vpop.f32.mrf.mxu0
  %938 = vmatprep.mubr.f32.mxu0 0.0
  %v939 = vand.u32 %v134, 4294901760
  %v940 = vsub.f32 %v134, %v939
  %v941 = vand.u32 %v940, 4294901760
  %942 = vmatmul.mubr.f32.gmra.mxu0 %v941
  %v943 = vpop.f32.mrf.mxu0
  %v944 = vadd.f32 %v748, %v943
  %v945 = vpop.f32.mrf.mxu0
  %946 = vmatprep.mubr.f32.mxu0 0.0
  %v947 = vand.u32 %v137, 4294901760
  %v948 = vsub.f32 %v137, %v947
  %v949 = vand.u32 %v948, 4294901760
  %950 = vmatmul.mubr.f32.gmra.mxu0 %v949
  %v951 = vpop.f32.mrf.mxu0
  %v952 = vadd.f32 %v755, %v951
  %v953 = vpop.f32.mrf.mxu0
  %954 = vmatprep.mubr.f32.mxu0 0.0
  %v955 = vand.u32 %v140, 4294901760
  %v956 = vsub.f32 %v140, %v955
  %v957 = vand.u32 %v956, 4294901760
  %958 = vmatmul.mubr.f32.gmra.mxu0 %v957
  %v959 = vpop.f32.mrf.mxu0
  %v960 = vadd.f32 %v762, %v959
  %v961 = vpop.f32.mrf.mxu0
  %962 = vmatprep.mubr.f32.mxu0 0.0
  %v963 = vand.u32 %v143, 4294901760
  %v964 = vsub.f32 %v143, %v963
  %v965 = vand.u32 %v964, 4294901760
  %966 = vmatmul.mubr.f32.gmra.mxu0 %v965
  %v967 = vpop.f32.mrf.mxu0
  %v968 = vadd.f32 %v769, %v967
  %v969 = vpop.f32.mrf.mxu0
  %970 = vmatprep.mubr.f32.mxu0 0.0
  %v971 = vand.u32 %v146, 4294901760
  %v972 = vsub.f32 %v146, %v971
  %v973 = vand.u32 %v972, 4294901760
  %974 = vmatmul.mubr.f32.gmra.mxu0 %v973
  %v975 = vpop.f32.mrf.mxu0
  %v976 = vadd.f32 %v776, %v975
  %v977 = vpop.f32.mrf.mxu0
  %978 = vmatprep.mubr.f32.mxu0 0.0
  %v979 = vand.u32 %v149, 4294901760
  %v980 = vsub.f32 %v149, %v979
  %v981 = vand.u32 %v980, 4294901760
  %982 = vmatmul.mubr.f32.gmra.mxu0 %v981
  %v983 = vpop.f32.mrf.mxu0
  %v984 = vadd.f32 %v783, %v983
  %v985 = vpop.f32.mrf.mxu0
  %986 = vmatprep.mubr.f32.mxu0 0.0
  %v987 = vand.u32 %v152, 4294901760
  %v988 = vsub.f32 %v152, %v987
  %v989 = vand.u32 %v988, 4294901760
  %990 = vmatmul.mubr.f32.gmra.mxu0 %v989
  %v991 = vpop.f32.mrf.mxu0
  %v992 = vadd.f32 %v790, %v991
  %v993 = vpop.f32.mrf.mxu0
  %994 = vmatprep.mubr.f32.mxu0 0.0
  %v995 = vand.u32 %v155, 4294901760
  %v996 = vsub.f32 %v155, %v995
  %v997 = vand.u32 %v996, 4294901760
  %998 = vmatmul.mubr.f32.gmra.mxu0 %v997
  %v999 = vpop.f32.mrf.mxu0
  %v1000 = vadd.f32 %v797, %v999
  %v1001 = vpop.f32.mrf.mxu0
  %1002 = vdwg.mxu0
  %1003 = vmatprep.subr.mxu0 0.0
  %1004 = vmatpush1.msra.mxu0 0.0
  %1005 = vmatprep.subr.mxu0 0.0
  %1006 = vmatpush1.msra.mxu0 0.0
  %1007 = vmatprep.subr.mxu0 0.0
  %1008 = vmatpush1.msra.mxu0 0.0
  %1009 = vmatprep.subr.mxu0 0.0
  %1010 = vmatpush1.msra.mxu0 0.0
  %1011 = vmatprep.subr.mxu0 0.0
  %1012 = vmatpush1.msra.mxu0 0.0
  %1013 = vmatprep.subr.mxu0 0.0
  %1014 = vmatpush1.msra.mxu0 0.0
  %1015 = vmatprep.subr.mxu0 0.0
  %v1016 = vand.u32 %v75, 4294901760
  %v1017 = vsub.f32 %v75, %v1016
  %v1018 = vand.u32 %v1017, 4294901760
  %1019 = vmatpush1.msra.mxu0 %v1018
  %1020 = vmatprep.subr.mxu0 0.0
  %v1021 = vand.u32 %v74, 4294901760
  %v1022 = vsub.f32 %v74, %v1021
  %v1023 = vand.u32 %v1022, 4294901760
  %1024 = vmatpush1.msra.mxu0 %v1023
  %1025 = vmatprep.subr.mxu0 0.0
  %v1026 = vand.u32 %v73, 4294901760
  %v1027 = vsub.f32 %v73, %v1026
  %v1028 = vand.u32 %v1027, 4294901760
  %1029 = vmatpush1.msra.mxu0 %v1028
  %1030 = vmatprep.subr.mxu0 0.0
  %v1031 = vand.u32 %v72, 4294901760
  %v1032 = vsub.f32 %v72, %v1031
  %v1033 = vand.u32 %v1032, 4294901760
  %1034 = vmatpush1.msra.mxu0 %v1033
  %1035 = vmatprep.subr.mxu0 0.0
  %v1036 = vand.u32 %v71, 4294901760
  %v1037 = vsub.f32 %v71, %v1036
  %v1038 = vand.u32 %v1037, 4294901760
  %1039 = vmatpush1.msra.mxu0 %v1038
  %1040 = vmatprep.subr.mxu0 0.0
  %v1041 = vand.u32 %v70, 4294901760
  %v1042 = vsub.f32 %v70, %v1041
  %v1043 = vand.u32 %v1042, 4294901760
  %1044 = vmatpush1.msra.mxu0 %v1043
  %1045 = vmatprep.subr.mxu0 0.0
  %v1046 = vand.u32 %v69, 4294901760
  %v1047 = vsub.f32 %v69, %v1046
  %v1048 = vand.u32 %v1047, 4294901760
  %1049 = vmatpush1.msra.mxu0 %v1048
  %1050 = vmatprep.subr.mxu0 0.0
  %v1051 = vand.u32 %v68, 4294901760
  %v1052 = vsub.f32 %v68, %v1051
  %v1053 = vand.u32 %v1052, 4294901760
  %1054 = vmatpush1.msra.mxu0 %v1053
  %1055 = vmatprep.subr.mxu0 0.0
  %v1056 = vand.u32 %v67, 4294901760
  %v1057 = vsub.f32 %v67, %v1056
  %v1058 = vand.u32 %v1057, 4294901760
  %1059 = vmatpush1.msra.mxu0 %v1058
  %1060 = vmatprep.subr.mxu0 0.0
  %v1061 = vand.u32 %v66, 4294901760
  %v1062 = vsub.f32 %v66, %v1061
  %v1063 = vand.u32 %v1062, 4294901760
  %1064 = vmatpush1.msra.mxu0 %v1063
  %1065 = vmatprep.subr.mxu0 0.0
  %1066 = vmatpush2.msra.mxu0 0.0
  %1067 = vmatprep.subr.mxu0 0.0
  %1068 = vmatpush2.msra.mxu0 0.0
  %1069 = vmatprep.subr.mxu0 0.0
  %1070 = vmatpush2.msra.mxu0 0.0
  %1071 = vmatprep.subr.mxu0 0.0
  %1072 = vmatpush2.msra.mxu0 0.0
  %1073 = vmatprep.subr.mxu0 0.0
  %1074 = vmatpush2.msra.mxu0 0.0
  %1075 = vmatprep.subr.mxu0 0.0
  %1076 = vmatpush2.msra.mxu0 0.0
  %1077 = vmatprep.subr.mxu0 0.0
  %1078 = vmatpush2.msra.mxu0 0.0
  %1079 = vmatprep.subr.mxu0 0.0
  %1080 = vmatpush2.msra.mxu0 0.0
  %1081 = vmatprep.subr.mxu0 0.0
  %1082 = vmatpush2.msra.mxu0 0.0
  %1083 = vmatprep.subr.mxu0 0.0
  %1084 = vmatpush2.msra.mxu0 0.0
  %1085 = vmatprep.subr.mxu0 0.0
  %1086 = vmatpush2.msra.mxu0 0.0
  %1087 = vmatprep.subr.mxu0 0.0
  %1088 = vmatpush2.msra.mxu0 0.0
  %1089 = vmatprep.subr.mxu0 0.0
  %1090 = vmatpush2.msra.mxu0 0.0
  %1091 = vmatprep.subr.mxu0 0.0
  %1092 = vmatpush2.msra.mxu0 0.0
  %1093 = vmatprep.subr.mxu0 0.0
  %1094 = vmatpush2.msra.mxu0 0.0
  %1095 = vmatprep.subr.mxu0 0.0
  %1096 = vmatpush2.msra.mxu0 0.0
  %1097 = vmatprep.mubr.f32.mxu0 0.0
  %v1098 = vand.u32 %v110, 4294901760
  %1099 = vmatmul.mubr.f32.gmra.mxu0 %v1098
  %v1100 = vpop.f32.mrf.mxu0
  %v1101 = vadd.f32 %v880, %v1100
  %v1102 = vpop.f32.mrf.mxu0
  %1103 = vmatprep.mubr.f32.mxu0 0.0
  %v1104 = vand.u32 %v113, 4294901760
  %1105 = vmatmul.mubr.f32.gmra.mxu0 %v1104
  %v1106 = vpop.f32.mrf.mxu0
  %v1107 = vadd.f32 %v888, %v1106
  %v1108 = vpop.f32.mrf.mxu0
  %1109 = vmatprep.mubr.f32.mxu0 0.0
  %v1110 = vand.u32 %v116, 4294901760
  %1111 = vmatmul.mubr.f32.gmra.mxu0 %v1110
  %v1112 = vpop.f32.mrf.mxu0
  %v1113 = vadd.f32 %v896, %v1112
  %v1114 = vpop.f32.mrf.mxu0
  %1115 = vmatprep.mubr.f32.mxu0 0.0
  %v1116 = vand.u32 %v119, 4294901760
  %1117 = vmatmul.mubr.f32.gmra.mxu0 %v1116
  %v1118 = vpop.f32.mrf.mxu0
  %v1119 = vadd.f32 %v904, %v1118
  %v1120 = vpop.f32.mrf.mxu0
  %1121 = vmatprep.mubr.f32.mxu0 0.0
  %v1122 = vand.u32 %v122, 4294901760
  %1123 = vmatmul.mubr.f32.gmra.mxu0 %v1122
  %v1124 = vpop.f32.mrf.mxu0
  %v1125 = vadd.f32 %v912, %v1124
  %v1126 = vpop.f32.mrf.mxu0
  %1127 = vmatprep.mubr.f32.mxu0 0.0
  %v1128 = vand.u32 %v125, 4294901760
  %1129 = vmatmul.mubr.f32.gmra.mxu0 %v1128
  %v1130 = vpop.f32.mrf.mxu0
  %v1131 = vadd.f32 %v920, %v1130
  %v1132 = vpop.f32.mrf.mxu0
  %1133 = vmatprep.mubr.f32.mxu0 0.0
  %v1134 = vand.u32 %v128, 4294901760
  %1135 = vmatmul.mubr.f32.gmra.mxu0 %v1134
  %v1136 = vpop.f32.mrf.mxu0
  %v1137 = vadd.f32 %v928, %v1136
  %v1138 = vpop.f32.mrf.mxu0
  %1139 = vmatprep.mubr.f32.mxu0 0.0
  %v1140 = vand.u32 %v131, 4294901760
  %1141 = vmatmul.mubr.f32.gmra.mxu0 %v1140
  %v1142 = vpop.f32.mrf.mxu0
  %v1143 = vadd.f32 %v936, %v1142
  %v1144 = vpop.f32.mrf.mxu0
  %1145 = vmatprep.mubr.f32.mxu0 0.0
  %v1146 = vand.u32 %v134, 4294901760
  %1147 = vmatmul.mubr.f32.gmra.mxu0 %v1146
  %v1148 = vpop.f32.mrf.mxu0
  %v1149 = vadd.f32 %v944, %v1148
  %v1150 = vpop.f32.mrf.mxu0
  %1151 = vmatprep.mubr.f32.mxu0 0.0
  %v1152 = vand.u32 %v137, 4294901760
  %1153 = vmatmul.mubr.f32.gmra.mxu0 %v1152
  %v1154 = vpop.f32.mrf.mxu0
  %v1155 = vadd.f32 %v952, %v1154
  %v1156 = vpop.f32.mrf.mxu0
  %1157 = vmatprep.mubr.f32.mxu0 0.0
  %v1158 = vand.u32 %v140, 4294901760
  %1159 = vmatmul.mubr.f32.gmra.mxu0 %v1158
  %v1160 = vpop.f32.mrf.mxu0
  %v1161 = vadd.f32 %v960, %v1160
  %v1162 = vpop.f32.mrf.mxu0
  %1163 = vmatprep.mubr.f32.mxu0 0.0
  %v1164 = vand.u32 %v143, 4294901760
  %1165 = vmatmul.mubr.f32.gmra.mxu0 %v1164
  %v1166 = vpop.f32.mrf.mxu0
  %v1167 = vadd.f32 %v968, %v1166
  %v1168 = vpop.f32.mrf.mxu0
  %1169 = vmatprep.mubr.f32.mxu0 0.0
  %v1170 = vand.u32 %v146, 4294901760
  %1171 = vmatmul.mubr.f32.gmra.mxu0 %v1170
  %v1172 = vpop.f32.mrf.mxu0
  %v1173 = vadd.f32 %v976, %v1172
  %v1174 = vpop.f32.mrf.mxu0
  %1175 = vmatprep.mubr.f32.mxu0 0.0
  %v1176 = vand.u32 %v149, 4294901760
  %1177 = vmatmul.mubr.f32.gmra.mxu0 %v1176
  %v1178 = vpop.f32.mrf.mxu0
  %v1179 = vadd.f32 %v984, %v1178
  %v1180 = vpop.f32.mrf.mxu0
  %1181 = vmatprep.mubr.f32.mxu0 0.0
  %v1182 = vand.u32 %v152, 4294901760
  %1183 = vmatmul.mubr.f32.gmra.mxu0 %v1182
  %v1184 = vpop.f32.mrf.mxu0
  %v1185 = vadd.f32 %v992, %v1184
  %v1186 = vpop.f32.mrf.mxu0
  %1187 = vmatprep.mubr.f32.mxu0 0.0
  %v1188 = vand.u32 %v155, 4294901760
  %1189 = vmatmul.mubr.f32.gmra.mxu0 %v1188
  %v1190 = vpop.f32.mrf.mxu0
  %v1191 = vadd.f32 %v1000, %v1190
  %v1192 = vpop.f32.mrf.mxu0
  %1193 = vdwg.mxu0
  %1194 = vmatprep.subr.mxu0 0.0
  %1195 = vmatpush1.msra.mxu0 0.0
  %1196 = vmatprep.subr.mxu0 0.0
  %1197 = vmatpush1.msra.mxu0 0.0
  %1198 = vmatprep.subr.mxu0 0.0
  %1199 = vmatpush1.msra.mxu0 0.0
  %1200 = vmatprep.subr.mxu0 0.0
  %1201 = vmatpush1.msra.mxu0 0.0
  %1202 = vmatprep.subr.mxu0 0.0
  %1203 = vmatpush1.msra.mxu0 0.0
  %1204 = vmatprep.subr.mxu0 0.0
  %1205 = vmatpush1.msra.mxu0 0.0
  %1206 = vmatprep.subr.mxu0 0.0
  %v1207 = vand.u32 %v75, 4294901760
  %1208 = vmatpush1.msra.mxu0 %v1207
  %1209 = vmatprep.subr.mxu0 0.0
  %v1210 = vand.u32 %v74, 4294901760
  %1211 = vmatpush1.msra.mxu0 %v1210
  %1212 = vmatprep.subr.mxu0 0.0
  %v1213 = vand.u32 %v73, 4294901760
  %1214 = vmatpush1.msra.mxu0 %v1213
  %1215 = vmatprep.subr.mxu0 0.0
  %v1216 = vand.u32 %v72, 4294901760
  %1217 = vmatpush1.msra.mxu0 %v1216
  %1218 = vmatprep.subr.mxu0 0.0
  %v1219 = vand.u32 %v71, 4294901760
  %1220 = vmatpush1.msra.mxu0 %v1219
  %1221 = vmatprep.subr.mxu0 0.0
  %v1222 = vand.u32 %v70, 4294901760
  %1223 = vmatpush1.msra.mxu0 %v1222
  %1224 = vmatprep.subr.mxu0 0.0
  %v1225 = vand.u32 %v69, 4294901760
  %1226 = vmatpush1.msra.mxu0 %v1225
  %1227 = vmatprep.subr.mxu0 0.0
  %v1228 = vand.u32 %v68, 4294901760
  %1229 = vmatpush1.msra.mxu0 %v1228
  %1230 = vmatprep.subr.mxu0 0.0
  %v1231 = vand.u32 %v67, 4294901760
  %1232 = vmatpush1.msra.mxu0 %v1231
  %1233 = vmatprep.subr.mxu0 0.0
  %v1234 = vand.u32 %v66, 4294901760
  %1235 = vmatpush1.msra.mxu0 %v1234
  %1236 = vmatprep.subr.mxu0 0.0
  %1237 = vmatpush2.msra.mxu0 0.0
  %1238 = vmatprep.subr.mxu0 0.0
  %1239 = vmatpush2.msra.mxu0 0.0
  %1240 = vmatprep.subr.mxu0 0.0
  %1241 = vmatpush2.msra.mxu0 0.0
  %1242 = vmatprep.subr.mxu0 0.0
  %1243 = vmatpush2.msra.mxu0 0.0
  %1244 = vmatprep.subr.mxu0 0.0
  %1245 = vmatpush2.msra.mxu0 0.0
  %1246 = vmatprep.subr.mxu0 0.0
  %1247 = vmatpush2.msra.mxu0 0.0
  %1248 = vmatprep.subr.mxu0 0.0
  %1249 = vmatpush2.msra.mxu0 0.0
  %1250 = vmatprep.subr.mxu0 0.0
  %1251 = vmatpush2.msra.mxu0 0.0
  %1252 = vmatprep.subr.mxu0 0.0
  %1253 = vmatpush2.msra.mxu0 0.0
  %1254 = vmatprep.subr.mxu0 0.0
  %1255 = vmatpush2.msra.mxu0 0.0
  %1256 = vmatprep.subr.mxu0 0.0
  %1257 = vmatpush2.msra.mxu0 0.0
  %1258 = vmatprep.subr.mxu0 0.0
  %1259 = vmatpush2.msra.mxu0 0.0
  %1260 = vmatprep.subr.mxu0 0.0
  %1261 = vmatpush2.msra.mxu0 0.0
  %1262 = vmatprep.subr.mxu0 0.0
  %1263 = vmatpush2.msra.mxu0 0.0
  %1264 = vmatprep.subr.mxu0 0.0
  %1265 = vmatpush2.msra.mxu0 0.0
  %1266 = vmatprep.subr.mxu0 0.0
  %1267 = vmatpush2.msra.mxu0 0.0
  %1268 = vmatprep.mubr.f32.mxu0 0.0
  %v1269 = vand.u32 %v110, 4294901760
  %1270 = vmatmul.mubr.f32.gmra.mxu0 %v1269
  %v1271 = vpop.f32.mrf.mxu0
  %v1272 = vadd.f32 %v1101, %v1271
  %v1273 = vpop.f32.mrf.mxu0
  %1274 = vmatprep.mubr.f32.mxu0 0.0
  %v1275 = vand.u32 %v113, 4294901760
  %1276 = vmatmul.mubr.f32.gmra.mxu0 %v1275
  %v1277 = vpop.f32.mrf.mxu0
  %v1278 = vadd.f32 %v1107, %v1277
  %v1279 = vpop.f32.mrf.mxu0
  %1280 = vmatprep.mubr.f32.mxu0 0.0
  %v1281 = vand.u32 %v116, 4294901760
  %1282 = vmatmul.mubr.f32.gmra.mxu0 %v1281
  %v1283 = vpop.f32.mrf.mxu0
  %v1284 = vadd.f32 %v1113, %v1283
  %v1285 = vpop.f32.mrf.mxu0
  %1286 = vmatprep.mubr.f32.mxu0 0.0
  %v1287 = vand.u32 %v119, 4294901760
  %1288 = vmatmul.mubr.f32.gmra.mxu0 %v1287
  %v1289 = vpop.f32.mrf.mxu0
  %v1290 = vadd.f32 %v1119, %v1289
  %v1291 = vpop.f32.mrf.mxu0
  %1292 = vmatprep.mubr.f32.mxu0 0.0
  %v1293 = vand.u32 %v122, 4294901760
  %1294 = vmatmul.mubr.f32.gmra.mxu0 %v1293
  %v1295 = vpop.f32.mrf.mxu0
  %v1296 = vadd.f32 %v1125, %v1295
  %v1297 = vpop.f32.mrf.mxu0
  %1298 = vmatprep.mubr.f32.mxu0 0.0
  %v1299 = vand.u32 %v125, 4294901760
  %1300 = vmatmul.mubr.f32.gmra.mxu0 %v1299
  %v1301 = vpop.f32.mrf.mxu0
  %v1302 = vadd.f32 %v1131, %v1301
  %v1303 = vpop.f32.mrf.mxu0
  %1304 = vmatprep.mubr.f32.mxu0 0.0
  %v1305 = vand.u32 %v128, 4294901760
  %1306 = vmatmul.mubr.f32.gmra.mxu0 %v1305
  %v1307 = vpop.f32.mrf.mxu0
  %v1308 = vadd.f32 %v1137, %v1307
  %v1309 = vpop.f32.mrf.mxu0
  %1310 = vmatprep.mubr.f32.mxu0 0.0
  %v1311 = vand.u32 %v131, 4294901760
  %1312 = vmatmul.mubr.f32.gmra.mxu0 %v1311
  %v1313 = vpop.f32.mrf.mxu0
  %v1314 = vadd.f32 %v1143, %v1313
  %v1315 = vpop.f32.mrf.mxu0
  %1316 = vmatprep.mubr.f32.mxu0 0.0
  %v1317 = vand.u32 %v134, 4294901760
  %1318 = vmatmul.mubr.f32.gmra.mxu0 %v1317
  %v1319 = vpop.f32.mrf.mxu0
  %v1320 = vadd.f32 %v1149, %v1319
  %v1321 = vpop.f32.mrf.mxu0
  %1322 = vmatprep.mubr.f32.mxu0 0.0
  %v1323 = vand.u32 %v137, 4294901760
  %1324 = vmatmul.mubr.f32.gmra.mxu0 %v1323
  %v1325 = vpop.f32.mrf.mxu0
  %v1326 = vadd.f32 %v1155, %v1325
  %v1327 = vpop.f32.mrf.mxu0
  %1328 = vmatprep.mubr.f32.mxu0 0.0
  %v1329 = vand.u32 %v140, 4294901760
  %1330 = vmatmul.mubr.f32.gmra.mxu0 %v1329
  %v1331 = vpop.f32.mrf.mxu0
  %v1332 = vadd.f32 %v1161, %v1331
  %v1333 = vpop.f32.mrf.mxu0
  %1334 = vmatprep.mubr.f32.mxu0 0.0
  %v1335 = vand.u32 %v143, 4294901760
  %1336 = vmatmul.mubr.f32.gmra.mxu0 %v1335
  %v1337 = vpop.f32.mrf.mxu0
  %v1338 = vadd.f32 %v1167, %v1337
  %v1339 = vpop.f32.mrf.mxu0
  %1340 = vmatprep.mubr.f32.mxu0 0.0
  %v1341 = vand.u32 %v146, 4294901760
  %1342 = vmatmul.mubr.f32.gmra.mxu0 %v1341
  %v1343 = vpop.f32.mrf.mxu0
  %v1344 = vadd.f32 %v1173, %v1343
  %v1345 = vpop.f32.mrf.mxu0
  %1346 = vmatprep.mubr.f32.mxu0 0.0
  %v1347 = vand.u32 %v149, 4294901760
  %1348 = vmatmul.mubr.f32.gmra.mxu0 %v1347
  %v1349 = vpop.f32.mrf.mxu0
  %v1350 = vadd.f32 %v1179, %v1349
  %v1351 = vpop.f32.mrf.mxu0
  %1352 = vmatprep.mubr.f32.mxu0 0.0
  %v1353 = vand.u32 %v152, 4294901760
  %1354 = vmatmul.mubr.f32.gmra.mxu0 %v1353
  %v1355 = vpop.f32.mrf.mxu0
  %v1356 = vadd.f32 %v1185, %v1355
  %v1357 = vpop.f32.mrf.mxu0
  %1358 = vmatprep.mubr.f32.mxu0 0.0
  %v1359 = vand.u32 %v155, 4294901760
  %1360 = vmatmul.mubr.f32.gmra.mxu0 %v1359
  %v1361 = vpop.f32.mrf.mxu0
  %v1362 = vadd.f32 %v1191, %v1361
  %v1363 = vpop.f32.mrf.mxu0
  %1364 = vdwg.mxu0
  %vm1365 = vcmask 261120
  %1366 = vst.msk [vmem:[%s2] sm:$0xff] %vm1365, %v1272
  %1367 = vst.msk [vmem:[%s2 + $0x8] sm:$0xff] %vm1365, %v1278
  %1368 = vst.msk [vmem:[%s2 + $0x10] sm:$0xff] %vm1365, %v1284
  %1369 = vst.msk [vmem:[%s2 + $0x18] sm:$0xff] %vm1365, %v1290
  %1370 = vst.msk [vmem:[%s2 + $0x20] sm:$0xff] %vm1365, %v1296
  %1371 = vst.msk [vmem:[%s2 + $0x28] sm:$0xff] %vm1365, %v1302
  %1372 = vst.msk [vmem:[%s2 + $0x30] sm:$0xff] %vm1365, %v1308
  %1373 = vst.msk [vmem:[%s2 + $0x38] sm:$0xff] %vm1365, %v1314
  %1374 = vst.msk [vmem:[%s2 + $0x40] sm:$0xff] %vm1365, %v1320
  %1375 = vst.msk [vmem:[%s2 + $0x48] sm:$0xff] %vm1365, %v1326
  %1376 = vst.msk [vmem:[%s2 + $0x50] sm:$0xff] %vm1365, %v1332
  %1377 = vst.msk [vmem:[%s2 + $0x58] sm:$0xff] %vm1365, %v1338
  %1378 = vst.msk [vmem:[%s2 + $0x60] sm:$0xff] %vm1365, %v1344
  %1379 = vst.msk [vmem:[%s2 + $0x68] sm:$0xff] %vm1365, %v1350
  %1380 = vst.msk [vmem:[%s2 + $0x70] sm:$0xff] %vm1365, %v1356
  %1381 = vst.msk [vmem:[%s2 + $0x78] sm:$0xff] %vm1365, %v1362
  // Predicated region
  $region10: #{temporal_embedding.1} parent=0 // pred_check
    _
  $region11: #{temporal_embedding.1} parent=0 // pred_check_branch
    %1383 = sbr.rel (0) target = $region13
  $region12: #{temporal_embedding.1} parent=0 // pred_region
    _
  $region13: #{temporal_embedding.1} parent=0 // pred_fallthru
    _
  // Predicated region
  $region14: #{temporal_embedding.1} parent=0 // pred_check
    _
  $region15: #{temporal_embedding.1} parent=0 // pred_check_branch
    %1385 = sbr.rel (0) target = $region17
  $region16: #{temporal_embedding.1} parent=0 // pred_region
    _
  $region17: #{temporal_embedding.1} parent=0 // pred_fallthru
    _

</llo_original>
